<compile_context>
chip_gen: v7x
topology: tpu7x:2x2x1
jax: 0.10.0
libtpu: 0.0.40
codegen_flags: <defaults>
</compile_context>

<pallas_src>
import jax
import jax.numpy as jnp
from jax.experimental import pallas as pl
from jax.experimental.pallas import tpu as pltpu

_LANES = 128  # vreg lane width (fast axis)


def _sublane_multiple(dtype) -> int:
    # Sub-32-bit dtypes pack along sublanes: f32 -> 8, bf16/f16 -> 16, i8/fp8 -> 32.
    itemsize = jnp.dtype(dtype).itemsize
    return max(8, 32 // max(1, itemsize))


def _zero_kernel(x_ref, o_ref):
    x = x_ref[...]
    o_ref[...] = x - x  # single VPU subtract; NaN/Inf -> NaN like PyTorch


def _zero_slab(slab, *, target_block_bytes=8 * 1024 * 1024):
    """Run the kernel on a lane-dense (rows, 128) slab."""
    rows, lanes = slab.shape
    itemsize = jnp.dtype(slab.dtype).itemsize
    sub = _sublane_multiple(slab.dtype)

    # Size the row tile by bytes (~8 MiB/block), rounded to the sublane multiple.
    tile_rows = max(sub, target_block_bytes // (lanes * itemsize))
    tile_rows = (tile_rows // sub) * sub
    if tile_rows >= rows:
        tile_rows = rows  # single grid step; block == full array dim is always legal
    grid_m = pl.cdiv(rows, tile_rows)  # ragged last block is masked by Pallas

    block_bytes = tile_rows * lanes * itemsize
    # 1 input + 1 output, double buffered = 4x block bytes, plus headroom.
    # Cap at 48 MiB so v7x (64 MiB physical VMEM/TC) keeps compiler scratch room.
    vmem_limit = int(min(48 * 1024 * 1024, 4 * block_bytes + 4 * 1024 * 1024))

    return pl.pallas_call(
        _zero_kernel,
        out_shape=jax.ShapeDtypeStruct((rows, lanes), slab.dtype),
        grid_spec=pltpu.PrefetchScalarGridSpec(
            num_scalar_prefetch=0,
            grid=(grid_m,),
            in_specs=[pl.BlockSpec((tile_rows, lanes), lambda i: (i, 0))],
            out_specs=pl.BlockSpec((tile_rows, lanes), lambda i: (i, 0)),
        ),
        compiler_params=pltpu.CompilerParams(
            # Embarrassingly parallel row axis; shardable across TCs on v7x.
            dimension_semantics=("parallel",),
            vmem_limit_bytes=vmem_limit,
        ),
        cost_estimate=pl.CostEstimate(
            flops=0,  # op is purely bandwidth-bound; bytes are what matter
            transcendentals=0,
            bytes_accessed=2 * rows * lanes * itemsize,
        ),
    )(slab)


def zero_forward(x, *, min_pallas_bytes=256 * 1024):
    """Pallas implementation of Zero.forward: returns x - x (same shape/dtype)."""
    total = x.size
    if total == 0:
        return x - x

    nbytes = total * jnp.dtype(x.dtype).itemsize
    if nbytes < min_pallas_bytes:
        # Small-input bypass: pallas_call launch cost + wrapper reshapes dominate;
        # let XLA fuse the subtraction into neighboring ops.
        return x - x

    if total % _LANES == 0:
        # Fast path (common NN case): lane-dense slab, zero padding / slicing.
        slab = jnp.reshape(x, (total // _LANES, _LANES))
        return _zero_slab(slab).reshape(x.shape)

    # Rare ragged path: pad to lane width, run kernel, slice back.
    flat = jnp.ravel(x)
    padded_total = pl.cdiv(total, _LANES) * _LANES
    flat = jnp.pad(flat, (0, padded_total - total))
    out = _zero_slab(flat.reshape(padded_total // _LANES, _LANES))
    return out.reshape(-1)[:total].reshape(x.shape)


if __name__ == "__main__":
    key = jax.random.PRNGKey(0)
    x = jax.random.normal(key, (2, 4, 16, 16), dtype=jnp.float32)

    # Force the Pallas path (the test tensor is below the small-input bypass).
    out = zero_forward(x, min_pallas_bytes=0)
    out = jax.block_until_ready(out)

    ref = jax.block_until_ready(x - x)  # pure-JAX reference

    assert out.shape == x.shape, out.shape
    assert out.dtype == x.dtype, out.dtype
    assert jnp.array_equal(out, ref), float(jnp.max(jnp.abs(out - ref)))

    # Also exercise the default wrapper (small-input bypass) for coverage.
    out2 = jax.block_until_ready(zero_forward(x))
    assert jnp.array_equal(out2, ref)

    print("KERNEL_OK")
</pallas_src>

<mosaic_0001>
module attributes {stable_mosaic.version = 11 : i64} {
  func.func @_zero_kernel(%arg0: i32, %arg1: memref<16x128xf32, #tpu.memory_space<vmem>>, %arg2: memref<16x128xf32, #tpu.memory_space<vmem>>) attributes {dimension_semantics = [#tpu.dimension_semantics<parallel>], iteration_bounds = array<i64: 1>, scalar_prefetch = 0 : i64, scratch_operands = 0 : i64, tpu.core_type = #tpu.core_type<tc>, window_params = [{transform_indices = @transform_0, window_bounds = array<i64: 16, 128>}, {transform_indices = @transform_1, window_bounds = array<i64: 16, 128>}]} {
    %c0 = arith.constant 0 : index
    %c0_0 = arith.constant 0 : index
    %0 = vector.load %arg1[%c0, %c0_0] : memref<16x128xf32, #tpu.memory_space<vmem>>, vector<16x128xf32>
    %1 = arith.subf %0, %0 : vector<16x128xf32>
    %c0_1 = arith.constant 0 : index
    %c0_2 = arith.constant 0 : index
    %2 = vector.load %arg2[%c0_1, %c0_2] : memref<16x128xf32, #tpu.memory_space<vmem>>, vector<16x128xf32>
    tpu.vector_store %arg2[%c0_1, %c0_2], %1 {strides = array<i32>} : memref<16x128xf32, #tpu.memory_space<vmem>>, vector<16x128xf32>,
    return
  }
  func.func @transform_0(%arg0: i32) -> (i32, i32) {
    %c0_i32 = arith.constant 0 : i32
    %c0_i32_0 = arith.constant 0 : i32
    return %arg0, %c0_i32 : i32, i32
  }
  func.func @transform_1(%arg0: i32) -> (i32, i32) {
    %c0_i32 = arith.constant 0 : i32
    %c0_i32_0 = arith.constant 0 : i32
    return %arg0, %c0_i32 : i32, i32
  }
}

</mosaic_0001>

<llo_original>
// kernel: tpu_custom_call.1
$region0: #{tpu_custom_call.1}
  #allocation0 [shape = 'u32[]', space=smem, size = 0x4, offset = 0x4, fixed_abs, tag = 'smem constant byte address 0x4 - core index']
  #allocation1 [shape = 'u32[144,128]{1,0:T(1,128)}', space=vmem, size = 0x12000, scoped, tag = 'internal scratch']
  %s0 = inlined_call_operand.hbm [shape: f32[16,128], index: 0, kind: input, shape index: {}]
  %s1 = inlined_call_operand.hbm [shape: f32[16,128], index: 1, kind: output, shape index: {}]
  %s2 = sld [smem:[#allocation0]]
  $region18: #{tpu_custom_call.1} parent=0
    _
  %s4 = ssub.s32 1, %s2
  %s5 = scalar_select 0, %s4, %s2
  $region1: #{tpu_custom_call.1} parent=0
    #allocation2 [shape = 'u8[8192]{0}', space=vmem, size = 0x2000, scoped, tag = 'input window, operand 0, single buffered']
    #allocation3 [shape = 's32[1]{0}', space=sflag, size = 0x4, scoped, tag = 'scoped memory for tpu_custom_call.1']
    #allocation4 [shape = 's32[1]{0}', space=sflag, size = 0x4, scoped, tag = 'scoped memory for tpu_custom_call.1']
    #allocation5 [shape = 'u8[8192]{0}', space=vmem, size = 0x2000, scoped, tag = 'output window, operand 0, single buffered']
    %6 = vsyncpa [#allocation3], 0
    %7 = vsyncpa [#allocation4], 0
    // Predicated region
    $region2: #{tpu_custom_call.1} parent=1 // pred_check
      _
    $region3: #{tpu_custom_call.1} parent=1 // pred_check_branch
      %9 = sbr.rel (0) target = $region5
    $region4: #{tpu_custom_call.1} parent=1 // pred_region
      %s11 = ssub.s32 256, 256
      %12 = vsyncadd [#allocation3], %s11
      %s13 = sshll.u32 [#allocation2], 4
      %s14 = int_to_ptr.vmem [resolvable:$true] %s13
      %19 = dma.hbm_to_vmem [thread:$0]  %s0, 256, %s14, [#allocation3], 128, 128, 8
    $region5: #{tpu_custom_call.1} parent=1 // pred_fallthru
      _
    // Predicated region
    $region6: #{tpu_custom_call.1} parent=1 // pred_check
      _
    $region7: #{tpu_custom_call.1} parent=1 // pred_check_branch
      %21 = sbr.rel (0) target = $region9
    $region8: #{tpu_custom_call.1} parent=1 // pred_region
      %22 = dma.done [#allocation3], 256
    $region9: #{tpu_custom_call.1} parent=1 // pred_fallthru
      _
    %v23 = vld [vmem:[#allocation2] sm:$0xff]
    %v24 = vld [vmem:[#allocation2 + $0x8] sm:$0xff]
    %v25 = vsub.f32 %v23, %v23
    %v26 = vsub.f32 %v24, %v24
    %27 = vst [vmem:[#allocation5] sm:$0xff] %v25
    %28 = vst [vmem:[#allocation5 + $0x8] sm:$0xff] %v26
    // Predicated region
    $region10: #{tpu_custom_call.1} parent=1 // pred_check
      _
    $region11: #{tpu_custom_call.1} parent=1 // pred_check_branch
      %30 = sbr.rel (0) target = $region13
    $region12: #{tpu_custom_call.1} parent=1 // pred_region
      %s32 = ssub.s32 256, 256
      %33 = vsyncadd [#allocation4], %s32
      %s34 = sshll.u32 [#allocation5], 4
      %s35 = int_to_ptr.vmem [resolvable:$true] %s34
      %40 = dma.vmem_to_hbm [thread:$0]  %s35, 256, %s1, [#allocation4], 128, 128, 8
    $region13: #{tpu_custom_call.1} parent=1 // pred_fallthru
      _
    // Predicated region
    $region14: #{tpu_custom_call.1} parent=1 // pred_check
      _
    $region15: #{tpu_custom_call.1} parent=1 // pred_check_branch
      %42 = sbr.rel (0) target = $region17
    $region16: #{tpu_custom_call.1} parent=1 // pred_region
      %43 = dma.done [#allocation4], 256
    $region17: #{tpu_custom_call.1} parent=1 // pred_fallthru
      _
    %44 = vsyncpa [#allocation3], 1
    %45 = vsyncpa [#allocation4], 1

</llo_original>
